<compile_context>
chip_gen: v5e
topology: v5e:2x2
jax: 0.10.0
libtpu: 0.0.40
codegen_flags: <defaults>
</compile_context>

<pallas_src>
import functools

import jax
import jax.numpy as jnp
import numpy as np
from jax.experimental import pallas as pl
from jax.experimental.pallas import tpu as pltpu

_INV_SQRT2 = 0.7071067811865476


def _erf(x, recip=None):
    # Abramowitz & Stegun 7.1.26 rational approximation, |err| < 1.5e-7
    # (far below bf16 precision). Only exp / mul / add / select -> lowers on Mosaic.
    a1, a2, a3, a4, a5 = (0.254829592, -0.284496736, 1.421413741,
                          -1.453152027, 1.061405429)
    p = 0.3275911
    ax = jnp.abs(x)
    d = 1.0 + p * ax
    t = recip(d) if recip is not None else 1.0 / d
    poly = ((((a5 * t + a4) * t + a3) * t + a2) * t + a1) * t
    core = 1.0 - poly * jnp.exp(-ax * ax)
    return jnp.where(x >= 0.0, core, -core)   # single select folds the sign


def _gelu_exact(x, recip=None):
    # torch.nn.GELU() default ("none") = exact erf-based GELU.
    return 0.5 * x * (1.0 + _erf(x * _INV_SQRT2, recip=recip))


# ----------------------------- Pallas kernel --------------------------------

def _moe_expert_kernel(counts_ref,            # SMEM scalar prefetch: (n_tiles, E) i32
                       x_ref,                 # (TM, D) bf16 token tile
                       w1_ref,                # (1, D, H) bf16
                       w2_ref,                # (1, H, D) bf16
                       coeff_ref,             # (TM, E) f32 routing coefficients
                       o_ref,                 # (TM, D) bf16 output tile
                       acc_ref):              # (TM, D) f32 accumulator scratch
    t = pl.program_id(0)
    e = pl.program_id(1)

    @pl.when(e == 0)
    def _():
        acc_ref[...] = jnp.zeros_like(acc_ref)

    # Skip all compute when no token of this tile is routed to expert e.
    @pl.when(counts_ref[t, e] > 0)
    def _():
        # grouped_linear1: f32 accumulate on the MXU.
        h = jnp.dot(x_ref[...], w1_ref[0], preferred_element_type=jnp.float32)
        # exact (erf) GELU in f32; divide goes to the EUP; single cast to bf16
        # as the input of the second GEMM (no f32->bf16->f32 round-trip).
        h = _gelu_exact(
            h, recip=lambda v: pl.reciprocal(v, approx=True)).astype(jnp.bfloat16)
        # grouped_linear2
        y = jnp.dot(h, w2_ref[0], preferred_element_type=jnp.float32)
        # scatter-combine: select this expert's routing coefficient per token
        # (lane-dense (TM, E) block + iota mask instead of lane-padded (TM,1) DMAs).
        tm_blk, n_e = coeff_ref.shape
        lane = jax.lax.broadcasted_iota(jnp.int32, (tm_blk, n_e), 1)
        c = jnp.sum(jnp.where(lane == e, coeff_ref[...], 0.0),
                    axis=1, keepdims=True)                     # (TM, 1) f32
        acc_ref[...] += c * y

    @pl.when(e == pl.num_programs(1) - 1)
    def _():
        o_ref[...] = acc_ref[...].astype(o_ref.dtype)


# ------------------------------- wrappers ------------------------------------

def _round_up(n, m):
    return ((n + m - 1) // m) * m


def _choose_tm(T, D, H, E):
    """Largest token-tile size whose VMEM footprint fits a conservative budget
    (sized to also fit v7x's 64 MiB physical VMEM with headroom)."""
    budget = 40 * 1024 * 1024
    w_bytes = 2 * 2 * 2 * (D * H + H * D)          # W1+W2 blocks, bf16, double-buffered
    lane_e = _round_up(max(E, 1), 128)             # coeff lane padding
    for tm in (1024, 512, 256, 128, 64, 32, 16, 8):
        tok = (tm * D * (2 * 2 + 2 * 2)            # x + out tiles, bf16, double-buffered
               + tm * D * 4                        # f32 accumulator scratch
               + tm * lane_e * 4 * 2               # coeff f32, double-buffered
               + tm * H * 4 * 2)                   # live f32 (TM, H) intermediates
        if w_bytes + tok <= budget:
            return tm
    return 8


def moe_mlp(x, w1, w2, coeff, counts, *, tm):
    T, D = x.shape
    E, _, H = w1.shape
    n_tiles = T // tm
    return pl.pallas_call(
        _moe_expert_kernel,
        out_shape=jax.ShapeDtypeStruct((T, D), x.dtype),
        grid_spec=pltpu.PrefetchScalarGridSpec(
            num_scalar_prefetch=1,                 # counts -> SMEM
            grid=(n_tiles, E),                     # token tiles outer, experts inner
            in_specs=[
                pl.BlockSpec((tm, D), lambda t, e, cnt: (t, 0)),       # x tile
                pl.BlockSpec((1, D, H), lambda t, e, cnt: (e, 0, 0)),  # W1[e]
                pl.BlockSpec((1, H, D), lambda t, e, cnt: (e, 0, 0)),  # W2[e]
                pl.BlockSpec((tm, E), lambda t, e, cnt: (t, 0)),       # coeff tile
            ],
            out_specs=pl.BlockSpec((tm, D), lambda t, e, cnt: (t, 0)),
            scratch_shapes=[pltpu.VMEM((tm, D), jnp.float32)],
        ),
        compiler_params=pltpu.CompilerParams(
            dimension_semantics=("parallel", "arbitrary"),
            vmem_limit_bytes=48 * 1024 * 1024,
        ),
    )(counts, x, w1, w2, coeff)


def fp8_linear_forward(inp, wg, w1, w2, top_k):
    E, D = wg.shape
    H = w1.shape[2]
    x = inp.reshape(-1, D)                                    # (T, n_embd)
    T = x.shape[0]

    # Gating + routing (tiny matmul, N=E): leave to XLA so it fuses with
    # softmax/top_k. bf16 logits match the torch bf16 Linear output.
    logits = jax.lax.dot_general(
        x, wg, (((1,), (1,)), ((), ())),
        preferred_element_type=jnp.float32).astype(jnp.bfloat16)
    probs = jax.nn.softmax(logits.astype(jnp.float32), axis=1)
    multiplier, selected = jax.lax.top_k(probs, top_k)        # (T, k), no renorm
    onehot = jax.nn.one_hot(selected, E, dtype=jnp.float32)   # (T, k, E)
    coeff = jnp.einsum('tk,tke->te', multiplier, onehot)      # (T, E) f32
    routed = (jnp.sum(onehot, axis=1) > 0).astype(jnp.int32)  # (T, E) 0/1

    # Token tiling (pad T up to a multiple of the tile; padded rows have
    # coeff == 0 and are excluded from the per-tile routed counts).
    tm = min(_choose_tm(T, D, H, E), _round_up(T, 8))
    t_pad = _round_up(T, tm)
    if t_pad != T:
        x = jnp.pad(x, ((0, t_pad - T), (0, 0)))
        coeff = jnp.pad(coeff, ((0, t_pad - T), (0, 0)))
        routed = jnp.pad(routed, ((0, t_pad - T), (0, 0)))
    n_tiles = t_pad // tm
    counts = routed.reshape(n_tiles, tm, E).sum(axis=1).astype(jnp.int32)

    out = moe_mlp(x, w1, w2, coeff, counts, tm=tm)            # (t_pad, D)
    return out[:T]                                            # (T, n_embd)


# --------------------------- pure-JAX reference ------------------------------

def reference_forward(inp, wg, w1, w2, top_k):
    x = inp.reshape(-1, inp.shape[-1])
    E = wg.shape[0]
    logits = jax.lax.dot_general(
        x, wg, (((1,), (1,)), ((), ())),
        preferred_element_type=jnp.float32).astype(jnp.bfloat16)
    probs = jax.nn.softmax(logits.astype(jnp.float32), axis=1)
    multiplier, selected = jax.lax.top_k(probs, top_k)
    onehot = jax.nn.one_hot(selected, E, dtype=jnp.float32)
    coeff = jnp.einsum('tk,tke->te', multiplier, onehot)      # (T, E)
    out = jnp.zeros(x.shape, jnp.float32)
    for e in range(E):
        h = jnp.dot(x, w1[e], preferred_element_type=jnp.float32)
        h = _gelu_exact(h).astype(jnp.bfloat16)
        y = jnp.dot(h, w2[e], preferred_element_type=jnp.float32)
        out = out + coeff[:, e:e + 1] * y
    return out.astype(x.dtype)


if __name__ == "__main__":
    batch, seq = 2, 8
    n_embd, n_inner, n_experts, top_k = 32, 64, 4, 2

    key = jax.random.PRNGKey(0)
    kx, kg, k1, k2 = jax.random.split(key, 4)

    def uinit(k, shape, fan_in):
        # deterministic torch-Linear-style init: U(-1/sqrt(fan_in), 1/sqrt(fan_in))
        bound = 1.0 / np.sqrt(fan_in)
        return jax.random.uniform(k, shape, jnp.float32, -bound, bound).astype(jnp.bfloat16)

    inp = jax.random.normal(kx, (batch, seq, n_embd), jnp.float32).astype(jnp.bfloat16)
    wg = uinit(kg, (n_experts, n_embd), n_embd)            # gating_network.weight (E, D)
    w1 = uinit(k1, (n_experts, n_embd, n_inner), n_embd)   # grouped_linear1: x @ w1[e]
    w2 = uinit(k2, (n_experts, n_inner, n_embd), n_inner)  # grouped_linear2: h @ w2[e]

    fwd = jax.jit(functools.partial(fp8_linear_forward, top_k=top_k))
    out = jax.block_until_ready(fwd(inp, wg, w1, w2))

    ref = reference_forward(inp, wg, w1, w2, top_k)
    np.testing.assert_allclose(np.asarray(out, np.float32),
                               np.asarray(ref, np.float32),
                               rtol=5e-2, atol=5e-2)
    print("KERNEL_OK")
</pallas_src>

<mosaic_0001>
module attributes {stable_mosaic.version = 11 : i64} {
  func.func @_moe_expert_kernel(%arg0: i32, %arg1: i32, %arg2: memref<1x4xi32, #tpu.memory_space<smem>>, %arg3: memref<16x32xbf16, #tpu.memory_space<vmem>>, %arg4: memref<1x32x64xbf16, #tpu.memory_space<vmem>>, %arg5: memref<1x64x32xbf16, #tpu.memory_space<vmem>>, %arg6: memref<16x4xf32, #tpu.memory_space<vmem>>, %arg7: memref<16x32xbf16, #tpu.memory_space<vmem>>, %arg8: memref<16x32xf32, #tpu.memory_space<vmem>>) attributes {dimension_semantics = [#tpu.dimension_semantics<parallel>, #tpu.dimension_semantics<arbitrary>], iteration_bounds = array<i64: 1, 4>, scalar_prefetch = 1 : i64, scratch_operands = 1 : i64, tpu.core_type = #tpu.core_type<tc>, window_params = [{transform_indices = @transform_0, window_bounds = array<i64: 16, 32>}, {transform_indices = @transform_1, window_bounds = array<i64: 1, 32, 64>}, {transform_indices = @transform_2, window_bounds = array<i64: 1, 64, 32>}, {transform_indices = @transform_3, window_bounds = array<i64: 16, 4>}, {transform_indices = @transform_4, window_bounds = array<i64: 16, 32>}]} {
    %c0_i32 = arith.constant 0 : i32
    %0 = arith.cmpi eq, %arg1, %c0_i32 : i32
    %1 = arith.extui %0 : i1 to i32
    %c0_i32_0 = arith.constant 0 : i32
    %2 = arith.cmpi ne, %1, %c0_i32_0 : i32
    scf.if %2 {
      %cst = arith.constant 0.000000e+00 : f32
      %12 = vector.broadcast %cst : f32 to vector<16x32xf32>
      %c0 = arith.constant 0 : index
      %c0_4 = arith.constant 0 : index
      %13 = vector.load %arg8[%c0, %c0_4] : memref<16x32xf32, #tpu.memory_space<vmem>>, vector<16x32xf32>
      tpu.vector_store %arg8[%c0, %c0_4], %12 {strides = array<i32>} : memref<16x32xf32, #tpu.memory_space<vmem>>, vector<16x32xf32>,
    } else {
    }
    %3 = arith.index_cast %arg0 : i32 to index
    %4 = arith.index_cast %arg1 : i32 to index
    %5 = memref.load %arg2[%3, %4] : memref<1x4xi32, #tpu.memory_space<smem>>
    %c0_i32_1 = arith.constant 0 : i32
    %6 = arith.cmpi sgt, %5, %c0_i32_1 : i32
    %7 = arith.extui %6 : i1 to i32
    %c0_i32_2 = arith.constant 0 : i32
    %8 = arith.cmpi ne, %7, %c0_i32_2 : i32
    scf.if %8 {
      %c0 = arith.constant 0 : index
      %c0_4 = arith.constant 0 : index
      %12 = vector.load %arg3[%c0, %c0_4] : memref<16x32xbf16, #tpu.memory_space<vmem>>, vector<16x32xbf16>
      %c0_5 = arith.constant 0 : index
      %c0_6 = arith.constant 0 : index
      %c0_7 = arith.constant 0 : index
      %13 = vector.load %arg4[%c0_5, %c0_6, %c0_7] : memref<1x32x64xbf16, #tpu.memory_space<vmem>>, vector<1x32x64xbf16>
      %14 = vector.shape_cast %13 : vector<1x32x64xbf16> to vector<32x64xbf16>
      %cst = arith.constant dense<0.000000e+00> : vector<16x64xf32>
      %15 = tpu.matmul %12, %14, %cst {dimension_numbers = #tpu.dot_dimension_numbers<[1], [0], [0], [1], [0, 0, 1, 1], [], []>} : vector<16x32xbf16>, vector<32x64xbf16>, vector<16x64xf32> -> vector<16x64xf32>
      %cst_8 = arith.constant 5.000000e-01 : f32
      %16 = vector.broadcast %cst_8 : f32 to vector<16x64xf32>
      %17 = arith.mulf %16, %15 : vector<16x64xf32>
      %cst_9 = arith.constant 0.707106769 : f32
      %18 = vector.broadcast %cst_9 : f32 to vector<16x64xf32>
      %19 = arith.mulf %15, %18 : vector<16x64xf32>
      %20 = math.absf %19 : vector<16x64xf32>
      %cst_10 = arith.constant 0.327591091 : f32
      %21 = vector.broadcast %cst_10 : f32 to vector<16x64xf32>
      %22 = arith.mulf %21, %20 : vector<16x64xf32>
      %cst_11 = arith.constant 1.000000e+00 : f32
      %23 = vector.broadcast %cst_11 : f32 to vector<16x64xf32>
      %24 = arith.addf %23, %22 : vector<16x64xf32>
      %25 = tpu.reciprocal %24 {approx = true} : vector<16x64xf32> -> vector<16x64xf32>
      %cst_12 = arith.constant 1.06140542 : f32
      %26 = vector.broadcast %cst_12 : f32 to vector<16x64xf32>
      %27 = arith.mulf %26, %25 : vector<16x64xf32>
      %cst_13 = arith.constant -1.45315206 : f32
      %28 = vector.broadcast %cst_13 : f32 to vector<16x64xf32>
      %29 = arith.addf %27, %28 : vector<16x64xf32>
      %30 = arith.mulf %29, %25 : vector<16x64xf32>
      %cst_14 = arith.constant 1.42141378 : f32
      %31 = vector.broadcast %cst_14 : f32 to vector<16x64xf32>
      %32 = arith.addf %30, %31 : vector<16x64xf32>
      %33 = arith.mulf %32, %25 : vector<16x64xf32>
      %cst_15 = arith.constant -0.284496725 : f32
      %34 = vector.broadcast %cst_15 : f32 to vector<16x64xf32>
      %35 = arith.addf %33, %34 : vector<16x64xf32>
      %36 = arith.mulf %35, %25 : vector<16x64xf32>
      %cst_16 = arith.constant 0.254829586 : f32
      %37 = vector.broadcast %cst_16 : f32 to vector<16x64xf32>
      %38 = arith.addf %36, %37 : vector<16x64xf32>
      %39 = arith.mulf %38, %25 : vector<16x64xf32>
      %cst_17 = arith.constant 0.000000e+00 : f32
      %40 = vector.broadcast %cst_17 : f32 to vector<16x64xf32>
      %41 = arith.subf %40, %20 : vector<16x64xf32>
      %42 = arith.mulf %41, %20 : vector<16x64xf32>
      %43 = math.exp %42 : vector<16x64xf32>
      %44 = arith.mulf %39, %43 : vector<16x64xf32>
      %cst_18 = arith.constant 1.000000e+00 : f32
      %45 = vector.broadcast %cst_18 : f32 to vector<16x64xf32>
      %46 = arith.subf %45, %44 : vector<16x64xf32>
      %cst_19 = arith.constant 0.000000e+00 : f32
      %47 = vector.broadcast %cst_19 : f32 to vector<16x64xf32>
      %48 = arith.cmpf oge, %19, %47 : vector<16x64xf32>
      %cst_20 = arith.constant 0.000000e+00 : f32
      %49 = vector.broadcast %cst_20 : f32 to vector<16x64xf32>
      %50 = arith.subf %49, %46 : vector<16x64xf32>
      %51 = arith.select %48, %46, %50 : vector<16x64xi1>, vector<16x64xf32>
      %cst_21 = arith.constant 1.000000e+00 : f32
      %52 = vector.broadcast %cst_21 : f32 to vector<16x64xf32>
      %53 = arith.addf %52, %51 : vector<16x64xf32>
      %54 = arith.mulf %17, %53 : vector<16x64xf32>
      %55 = arith.truncf %54 : vector<16x64xf32> to vector<16x64xbf16>
      %c0_22 = arith.constant 0 : index
      %c0_23 = arith.constant 0 : index
      %c0_24 = arith.constant 0 : index
      %56 = vector.load %arg5[%c0_22, %c0_23, %c0_24] : memref<1x64x32xbf16, #tpu.memory_space<vmem>>, vector<1x64x32xbf16>
      %57 = vector.shape_cast %56 : vector<1x64x32xbf16> to vector<64x32xbf16>
      %cst_25 = arith.constant dense<0.000000e+00> : vector<16x32xf32>
      %58 = tpu.matmul %55, %57, %cst_25 {dimension_numbers = #tpu.dot_dimension_numbers<[1], [0], [0], [1], [0, 0, 1, 1], [], []>} : vector<16x64xbf16>, vector<64x32xbf16>, vector<16x32xf32> -> vector<16x32xf32>
      %59 = tpu.iota {dimensions = array<i32: 1>} : vector<16x4xi32>
      %60 = vector.broadcast %arg1 : i32 to vector<16x4xi32>
      %61 = arith.cmpi eq, %59, %60 : vector<16x4xi32>
      %c0_26 = arith.constant 0 : index
      %c0_27 = arith.constant 0 : index
      %62 = vector.load %arg6[%c0_26, %c0_27] : memref<16x4xf32, #tpu.memory_space<vmem>>, vector<16x4xf32>
      %cst_28 = arith.constant 0.000000e+00 : f32
      %63 = vector.broadcast %cst_28 : f32 to vector<16x4xf32>
      %64 = arith.select %61, %62, %63 : vector<16x4xi1>, vector<16x4xf32>
      %cst_29 = arith.constant dense<0.000000e+00> : vector<16xf32>
      %65 = vector.multi_reduction <add>, %64, %cst_29 [1] : vector<16x4xf32> to vector<16xf32>
      %66 = vector.shape_cast %65 : vector<16xf32> to vector<16x1xf32>
      %c0_30 = arith.constant 0 : index
      %c0_31 = arith.constant 0 : index
      %67 = vector.load %arg8[%c0_30, %c0_31] : memref<16x32xf32, #tpu.memory_space<vmem>>, vector<16x32xf32>
      %68 = vector.broadcast %66 : vector<16x1xf32> to vector<16x32xf32>
      %69 = arith.mulf %68, %58 : vector<16x32xf32>
      %70 = arith.addf %67, %69 : vector<16x32xf32>
      %c0_32 = arith.constant 0 : index
      %c0_33 = arith.constant 0 : index
      %71 = vector.load %arg8[%c0_32, %c0_33] : memref<16x32xf32, #tpu.memory_space<vmem>>, vector<16x32xf32>
      tpu.vector_store %arg8[%c0_32, %c0_33], %70 {strides = array<i32>} : memref<16x32xf32, #tpu.memory_space<vmem>>, vector<16x32xf32>,
    } else {
    }
    %c3_i32 = arith.constant 3 : i32
    %9 = arith.cmpi eq, %arg1, %c3_i32 : i32
    %10 = arith.extui %9 : i1 to i32
    %c0_i32_3 = arith.constant 0 : i32
    %11 = arith.cmpi ne, %10, %c0_i32_3 : i32
    scf.if %11 {
      %c0 = arith.constant 0 : index
      %c0_4 = arith.constant 0 : index
      %12 = vector.load %arg8[%c0, %c0_4] : memref<16x32xf32, #tpu.memory_space<vmem>>, vector<16x32xf32>
      %13 = arith.truncf %12 : vector<16x32xf32> to vector<16x32xbf16>
      %c0_5 = arith.constant 0 : index
      %c0_6 = arith.constant 0 : index
      %14 = vector.load %arg7[%c0_5, %c0_6] : memref<16x32xbf16, #tpu.memory_space<vmem>>, vector<16x32xbf16>
      tpu.vector_store %arg7[%c0_5, %c0_6], %13 {strides = array<i32>} : memref<16x32xbf16, #tpu.memory_space<vmem>>, vector<16x32xbf16>,
    } else {
    }
    return
  }
  func.func @transform_0(%arg0: i32, %arg1: i32, %arg2: memref<1x4xi32, #tpu.memory_space<smem>>) -> (i32, i32) {
    %c0_i32 = arith.constant 0 : i32
    %c0_i32_0 = arith.constant 0 : i32
    return %arg0, %c0_i32 : i32, i32
  }
  func.func @transform_1(%arg0: i32, %arg1: i32, %arg2: memref<1x4xi32, #tpu.memory_space<smem>>) -> (i32, i32, i32) {
    %c0_i32 = arith.constant 0 : i32
    %c0_i32_0 = arith.constant 0 : i32
    %c0_i32_1 = arith.constant 0 : i32
    return %arg1, %c0_i32, %c0_i32_0 : i32, i32, i32
  }
  func.func @transform_2(%arg0: i32, %arg1: i32, %arg2: memref<1x4xi32, #tpu.memory_space<smem>>) -> (i32, i32, i32) {
    %c0_i32 = arith.constant 0 : i32
    %c0_i32_0 = arith.constant 0 : i32
    %c0_i32_1 = arith.constant 0 : i32
    return %arg1, %c0_i32, %c0_i32_0 : i32, i32, i32
  }
  func.func @transform_3(%arg0: i32, %arg1: i32, %arg2: memref<1x4xi32, #tpu.memory_space<smem>>) -> (i32, i32) {
    %c0_i32 = arith.constant 0 : i32
    %c0_i32_0 = arith.constant 0 : i32
    return %arg0, %c0_i32 : i32, i32
  }
  func.func @transform_4(%arg0: i32, %arg1: i32, %arg2: memref<1x4xi32, #tpu.memory_space<smem>>) -> (i32, i32) {
    %c0_i32 = arith.constant 0 : i32
    %c0_i32_0 = arith.constant 0 : i32
    return %arg0, %c0_i32 : i32, i32
  }
}

</mosaic_0001>

<llo_original>
// kernel: fp8_linear_forward.1
$region0: #{fp8_linear_forward.1}
  #allocation0 [shape = 'u32[]', space=smem, size = 0x4, offset = 0x4, fixed_abs, tag = 'smem constant byte address 0x4 - core index']
  #allocation1 [shape = 'u32[72,128]{1,0:T(1,128)}', space=vmem, size = 0x9000, scoped, tag = 'internal scratch']
  #allocation2 [shape = 'f32[16,32]{1,0:T(8,128)}', space=vmem, size = 0x2000, scoped, tag = 'scratch operand']
  #allocation3 [shape = 's32[1]{0}', space=sflag, size = 0x4, scoped, tag = 'scoped memory for fp8_linear_forward.1']
  #allocation4 [shape = 'u8[512]{0}', space=smem, size = 0x200, scoped, tag = 'prefetched SMEM operand 0']
  %s0 = inlined_call_operand.vmem [shape: s32[1,4], index: 0, kind: input, shape index: {}]
  %s1 = inlined_call_operand.vmem [shape: bf16[16,32], index: 1, kind: input, shape index: {}]
  %s2 = inlined_call_operand.vmem [shape: bf16[4,32,64], index: 2, kind: input, shape index: {}]
  %s3 = inlined_call_operand.vmem [shape: bf16[4,64,32], index: 3, kind: input, shape index: {}]
  %s4 = inlined_call_operand.vmem [shape: f32[16,4], index: 4, kind: input, shape index: {}]
  %s5 = inlined_call_operand.hbm [shape: bf16[16,32], index: 5, kind: output, shape index: {}]
  %s6 = sld [smem:[#allocation0]]
  $region61: #{fp8_linear_forward.1} parent=0
    _
  %s8 = ssub.s32 1, %s6
  %s9 = scalar_select 0, %s8, %s6
  %s11 = sshll.u32 %s0, 4
  %s12 = int_to_ptr.vmem [resolvable:$true] %s11
  %14 = dma.vmem_to_smem %s12, 16, [#allocation4], [#allocation3]
  %16 = dma.done [#allocation3], 16
  %17 = sfence
  $region1: #{fp8_linear_forward.1} parent=0
    #allocation5 [shape = 'u8[4096]{0}', space=vmem, size = 0x1000, scoped, tag = 'output window, operand 0, single buffered']
    #allocation6 [shape = 's32[2]{0}', space=sflag, size = 0x8, scoped, tag = 'scoped memory for fp8_linear_forward.1']
    %18 = vsyncpa [#allocation6], 0
    loop: start=0, step=1, limit=6
    $region2: #{fp8_linear_forward.1} parent=1 // loop_pre_header
      _
    $region3: #{fp8_linear_forward.1} parent=1 // loop_header
      %s20 = sphi 0, %s24
      %p21 = scmp.ge.s32.totalorder %s20, 6
      %s27 = sphi 0, %s39
      %s28 = sphi 0, %s35
      %s29 = sphi 0, %s27
      %s30 = sphi 0, %s28
      %s31 = sphi 0, %s29
      %s32 = sphi 0, %s30
      %s42 = sphi 0, %s44
      %s45 = sphi 0, %s42
      %s46 = sphi 0, %s45
      %s62 = sphi 0, %s46
      %s68 = sphi 0, %s70
      %s71 = sphi 0, %s68
      %s72 = sphi 0, %s71
      %s88 = sphi 0, %s72
      %s94 = sphi 0, %s96
      %s97 = sphi 0, %s94
      %s98 = sphi 0, %s97
      %s114 = sphi 0, %s98
      %s120 = sphi 0, %s122
      %s123 = sphi 0, %s120
      %s124 = sphi 0, %s123
      %s140 = sphi 0, %s124
      %s146 = sphi 0, %s148
      %s149 = sphi 0, %s146
      %s150 = sphi 0, %s149
      %s166 = sphi 0, %s150
    $region4: #{fp8_linear_forward.1} parent=1 // loop_header_branch
      %23 = sbr.rel (%p21) target = $region8
    $region5: #{fp8_linear_forward.1} parent=1 // loop_body
      %s25 = ssub.s32 %s20, 1
      %s26 = ssub.s32 %s20, 2
      %s33 = sadd.s32 1, %s28
      %p34 = scmp.ge.s32.totalorder %s33, 4
      %s35 = scalar_select %p34, 0, %s33
      %s36 = sadd.s32 1, %s27
      %s37 = scalar_select %p34, %s36, %s27
      %p38 = scmp.ge.s32.totalorder %s37, 1
      %s39 = scalar_select %p38, 0, %s37
      %s40 = ssub.s32 %s27, %s39
      %p41 = scmp.eq.s32.totalorder %s40, 0
      %s43 = sadd.s32 %s42, 1
      %s44 = scalar_select %p41, %s42, %s43
      %p47 = pneg %p41
      %p48 = scmp.eq.s32.totalorder %s20, 3
      %p49 = por %p47, %p48
      %p50 = scmp.ne.s32.totalorder %s42, %s45
      %p51 = scmp.eq.s32.totalorder %s20, 0
      %p52 = por %p50, %p51
      %p53 = scmp.ne.s32.totalorder %s42, %s45
      %p54 = scmp.eq.s32.totalorder %s25, 3
      %p55 = por %p53, %p54
      %p56 = scmp.ne.s32.totalorder %s45, %s46
      %p57 = scmp.eq.s32.totalorder %s25, 0
      %p58 = por %p56, %p57
      %p59 = scmp.ne.s32.totalorder %s45, %s46
      %p60 = scmp.eq.s32.totalorder %s26, 3
      %p61 = por %p59, %p60
      %p63 = scmp.ne.s32.totalorder %s46, %s62
      %p64 = scmp.eq.s32.totalorder %s26, 0
      %p65 = por %p63, %p64
      %s66 = ssub.s32 %s28, %s35
      %p67 = scmp.eq.s32.totalorder %s66, 0
      %s69 = sadd.s32 %s68, 1
      %s70 = scalar_select %p67, %s68, %s69
      %p73 = pneg %p67
      %p74 = scmp.eq.s32.totalorder %s20, 3
      %p75 = por %p73, %p74
      %p76 = scmp.ne.s32.totalorder %s68, %s71
      %p77 = scmp.eq.s32.totalorder %s20, 0
      %p78 = por %p76, %p77
      %p79 = scmp.ne.s32.totalorder %s68, %s71
      %p80 = scmp.eq.s32.totalorder %s25, 3
      %p81 = por %p79, %p80
      %p82 = scmp.ne.s32.totalorder %s71, %s72
      %p83 = scmp.eq.s32.totalorder %s25, 0
      %p84 = por %p82, %p83
      %p85 = scmp.ne.s32.totalorder %s71, %s72
      %p86 = scmp.eq.s32.totalorder %s26, 3
      %p87 = por %p85, %p86
      %p89 = scmp.ne.s32.totalorder %s72, %s88
      %p90 = scmp.eq.s32.totalorder %s26, 0
      %p91 = por %p89, %p90
      %s92 = ssub.s32 %s28, %s35
      %p93 = scmp.eq.s32.totalorder %s92, 0
      %s95 = sadd.s32 %s94, 1
      %s96 = scalar_select %p93, %s94, %s95
      %p99 = pneg %p93
      %p100 = scmp.eq.s32.totalorder %s20, 3
      %p101 = por %p99, %p100
      %p102 = scmp.ne.s32.totalorder %s94, %s97
      %p103 = scmp.eq.s32.totalorder %s20, 0
      %p104 = por %p102, %p103
      %p105 = scmp.ne.s32.totalorder %s94, %s97
      %p106 = scmp.eq.s32.totalorder %s25, 3
      %p107 = por %p105, %p106
      %p108 = scmp.ne.s32.totalorder %s97, %s98
      %p109 = scmp.eq.s32.totalorder %s25, 0
      %p110 = por %p108, %p109
      %p111 = scmp.ne.s32.totalorder %s97, %s98
      %p112 = scmp.eq.s32.totalorder %s26, 3
      %p113 = por %p111, %p112
      %p115 = scmp.ne.s32.totalorder %s98, %s114
      %p116 = scmp.eq.s32.totalorder %s26, 0
      %p117 = por %p115, %p116
      %s118 = ssub.s32 %s27, %s39
      %p119 = scmp.eq.s32.totalorder %s118, 0
      %s121 = sadd.s32 %s120, 1
      %s122 = scalar_select %p119, %s120, %s121
      %p125 = pneg %p119
      %p126 = scmp.eq.s32.totalorder %s20, 3
      %p127 = por %p125, %p126
      %p128 = scmp.ne.s32.totalorder %s120, %s123
      %p129 = scmp.eq.s32.totalorder %s20, 0
      %p130 = por %p128, %p129
      %p131 = scmp.ne.s32.totalorder %s120, %s123
      %p132 = scmp.eq.s32.totalorder %s25, 3
      %p133 = por %p131, %p132
      %p134 = scmp.ne.s32.totalorder %s123, %s124
      %p135 = scmp.eq.s32.totalorder %s25, 0
      %p136 = por %p134, %p135
      %p137 = scmp.ne.s32.totalorder %s123, %s124
      %p138 = scmp.eq.s32.totalorder %s26, 3
      %p139 = por %p137, %p138
      %p141 = scmp.ne.s32.totalorder %s124, %s140
      %p142 = scmp.eq.s32.totalorder %s26, 0
      %p143 = por %p141, %p142
      %s144 = ssub.s32 %s27, %s39
      %p145 = scmp.eq.s32.totalorder %s144, 0
      %s147 = sadd.s32 %s146, 1
      %s148 = scalar_select %p145, %s146, %s147
      %p151 = pneg %p145
      %p152 = scmp.eq.s32.totalorder %s20, 3
      %p153 = por %p151, %p152
      %p154 = scmp.ne.s32.totalorder %s146, %s149
      %p155 = scmp.eq.s32.totalorder %s20, 0
      %p156 = por %p154, %p155
      %p157 = scmp.ne.s32.totalorder %s146, %s149
      %p158 = scmp.eq.s32.totalorder %s25, 3
      %p159 = por %p157, %p158
      %p160 = scmp.ne.s32.totalorder %s149, %s150
      %p161 = scmp.eq.s32.totalorder %s25, 0
      %p162 = por %p160, %p161
      %p163 = scmp.ne.s32.totalorder %s149, %s150
      %p164 = scmp.eq.s32.totalorder %s26, 3
      %p165 = por %p163, %p164
      %p167 = scmp.ne.s32.totalorder %s150, %s166
      %p168 = scmp.eq.s32.totalorder %s26, 0
      %p169 = por %p167, %p168
      %p170 = scmp.le.s32.totalorder 1, %s20
      %p171 = scmp.lt.s32.totalorder %s20, 5
      %p172 = pnand %p170, %p171
      %p173 = pneg %p172
      // Predicated region
      $region9: #{fp8_linear_forward.1} parent=5 // pred_check
        _
      $region10: #{fp8_linear_forward.1} parent=5 // pred_check_branch
        %175 = sbr.rel (%p172) target = $region12
      $region11: #{fp8_linear_forward.1} parent=5 // pred_region
        %s176 = ssub.s32 %s20, 1
        // Predicated region
        $region13: #{fp8_linear_forward.1} parent=11 // pred_check
          %p177 = pneg %p58
        $region14: #{fp8_linear_forward.1} parent=11 // pred_check_branch
          %179 = sbr.rel (%p177) target = $region16
        $region15: #{fp8_linear_forward.1} parent=11 // pred_region
          %s180 = smul.u32 2, %s29
          %p181 = scmp.lt.s32.totalorder %s180, 1
          %s182 = scalar_select %p181, %s180, 1
          %s183 = smul.addr %s182, 4
          %s184 = scalar_lea.vmem %s1, %s183
          %s185 = smul.u32 2, %s29
        $region16: #{fp8_linear_forward.1} parent=11 // pred_fallthru
          _
        // Predicated region
        $region17: #{fp8_linear_forward.1} parent=11 // pred_check
          %p186 = pneg %p136
        $region18: #{fp8_linear_forward.1} parent=11 // pred_check_branch
          %188 = sbr.rel (%p186) target = $region20
        $region19: #{fp8_linear_forward.1} parent=11 // pred_region
          %s189 = smul.u32 2, %s29
          %p190 = scmp.lt.s32.totalorder %s189, 1
          %s191 = scalar_select %p190, %s189, 1
          %s192 = smul.addr %s191, 8
          %s193 = scalar_lea.vmem %s4, %s192
          %s194 = smul.u32 2, %s29
        $region20: #{fp8_linear_forward.1} parent=11 // pred_fallthru
          _
      $region12: #{fp8_linear_forward.1} parent=5 // pred_fallthru
        _
      %p195 = scmp.lt.s32.totalorder %s20, 4
      // Predicated region
      $region21: #{fp8_linear_forward.1} parent=5 // pred_check
        %p196 = pneg %p195
      $region22: #{fp8_linear_forward.1} parent=5 // pred_check_branch
        %198 = sbr.rel (%p196) target = $region24
      $region23: #{fp8_linear_forward.1} parent=5 // pred_region
        // Predicated region
        $region25: #{fp8_linear_forward.1} parent=23 // pred_check
          %p199 = pneg %p78
        $region26: #{fp8_linear_forward.1} parent=23 // pred_check_branch
          %201 = sbr.rel (%p199) target = $region28
        $region27: #{fp8_linear_forward.1} parent=23 // pred_region
          %p202 = scmp.lt.s32.totalorder %s28, 3
          %s203 = scalar_select %p202, %s28, 3
          %s204 = smul.addr %s203, 4
          %s205 = smul.addr %s204, 4
          %s206 = scalar_lea.vmem %s2, %s205
        $region28: #{fp8_linear_forward.1} parent=23 // pred_fallthru
          _
        // Predicated region
        $region29: #{fp8_linear_forward.1} parent=23 // pred_check
          %p207 = pneg %p104
        $region30: #{fp8_linear_forward.1} parent=23 // pred_check_branch
          %209 = sbr.rel (%p207) target = $region32
        $region31: #{fp8_linear_forward.1} parent=23 // pred_region
          %p210 = scmp.lt.s32.totalorder %s28, 3
          %s211 = scalar_select %p210, %s28, 3
          %s212 = smul.addr %s211, 8
          %s213 = smul.addr %s212, 4
          %s214 = scalar_lea.vmem %s3, %s213
        $region32: #{fp8_linear_forward.1} parent=23 // pred_fallthru
          _
      $region24: #{fp8_linear_forward.1} parent=5 // pred_fallthru
        _
      %p215 = scmp.le.s32.totalorder 1, %s20
      %p216 = scmp.lt.s32.totalorder %s20, 5
      %p217 = pnand %p215, %p216
      %p218 = pneg %p217
      // Predicated region
      $region33: #{fp8_linear_forward.1} parent=5 // pred_check
        _
      $region34: #{fp8_linear_forward.1} parent=5 // pred_check_branch
        %220 = sbr.rel (%p217) target = $region36
      $region35: #{fp8_linear_forward.1} parent=5 // pred_region
        %s221 = ssub.s32 %s20, 1
        %s222 = smul.u32 2, %s29
        %p223 = scmp.lt.s32.totalorder %s222, 1
        %s224 = scalar_select %p223, %s222, 1
        %s225 = smul.addr %s224, 4
        %s226 = scalar_lea.vmem %s1, %s225
        %p227 = pneg %p58
        %p228 = pneg %p55
        %p229 = scmp.lt.s32.totalorder %s30, 3
        %s230 = scalar_select %p229, %s30, 3
        %s231 = smul.addr %s230, 4
        %s232 = smul.addr %s231, 4
        %s233 = scalar_lea.vmem %s2, %s232
        %p234 = pneg %p84
        %p235 = pneg %p81
        %p236 = scmp.lt.s32.totalorder %s30, 3
        %s237 = scalar_select %p236, %s30, 3
        %s238 = smul.addr %s237, 8
        %s239 = smul.addr %s238, 4
        %s240 = scalar_lea.vmem %s3, %s239
        %p241 = pneg %p110
        %p242 = pneg %p107
        %s243 = smul.u32 2, %s29
        %p244 = scmp.lt.s32.totalorder %s243, 1
        %s245 = scalar_select %p244, %s243, 1
        %s246 = smul.addr %s245, 8
        %s247 = scalar_lea.vmem %s4, %s246
        %p248 = pneg %p136
        %p249 = pneg %p133
        %p250 = pneg %p162
        %p251 = pneg %p159
        %s252 = smul.u32 2, %s29
        %p253 = scmp.lt.s32.totalorder %s252, 1
        %s254 = scalar_select %p253, %s252, 1
        %s255 = smul.addr %s254, 4
        %s256 = scalar_lea.vmem %s1, %s255
        %s257 = smul.u32 2, %s29
        %p258 = scmp.lt.s32.totalorder %s30, 3
        %s259 = scalar_select %p258, %s30, 3
        %s260 = smul.addr %s259, 4
        %s261 = smul.addr %s260, 4
        %s262 = scalar_lea.vmem %s2, %s261
        %p263 = scmp.lt.s32.totalorder %s30, 3
        %s264 = scalar_select %p263, %s30, 3
        %s265 = smul.addr %s264, 8
        %s266 = smul.addr %s265, 4
        %s267 = scalar_lea.vmem %s3, %s266
        %s268 = smul.u32 2, %s29
        %p269 = scmp.lt.s32.totalorder %s268, 1
        %s270 = scalar_select %p269, %s268, 1
        %s271 = smul.addr %s270, 8
        %s272 = scalar_lea.vmem %s4, %s271
        %s273 = smul.u32 2, %s29
        %s274 = smul.u32 2, %s29
        %p276 = scmp.eq.s32.totalorder %s30, 0
        // Predicated region
        $region37: #{fp8_linear_forward.1} parent=35 // pred_check
          %p277 = pneg %p276
        $region38: #{fp8_linear_forward.1} parent=35 // pred_check_branch
          %279 = sbr.rel (%p277) target = $region40
        $region39: #{fp8_linear_forward.1} parent=35 // pred_region
          %vm280 = vcmask 261120
          %281 = vst.msk [vmem:[#allocation2] sm:$0xff] %vm280, 0.0
          %282 = vst.msk [vmem:[#allocation2 + $0x8] sm:$0xff] %vm280, 0.0
        $region40: #{fp8_linear_forward.1} parent=35 // pred_fallthru
          _
        %s283 = sshra.s32 %s30, 7
        %s284 = sand.u32 %s30, 127
        %s285 = sadd.s32 %s283, %s29
        %s286 = smul.u32 %s285, 128
        %s287 = sshra.s32 %s30, 7
        %s288 = sand.u32 %s30, 127
        %s289 = sadd.s32 %s286, %s288
        %s290 = sld [smem:[#allocation4 + %s289]]
        %p291 = scmp.gt.s32.totalorder %s290, 0
        // Predicated region
        $region41: #{fp8_linear_forward.1} parent=35 // pred_check
          %p292 = pneg %p291
        $region42: #{fp8_linear_forward.1} parent=35 // pred_check_branch
          %294 = sbr.rel (%p292) target = $region44
        $region43: #{fp8_linear_forward.1} parent=35 // pred_region
          %v295 = vld [vmem:[%s256] sm:$0xf]
          %v296 = vld [vmem:[%s256 + $0x4] sm:$0xf]
          %v297 = vld [vmem:[%s262] sm:$0xf]
          %v298 = vld [vmem:[%s262 + $0x4] sm:$0xf]
          %v299 = vld [vmem:[%s262 + $0x8] sm:$0xf]
          %v300 = vld [vmem:[%s262 + $0xc] sm:$0xf]
          %v303 = vunpack.c.l.b16 %v295
          %v304 = vunpack.c.l.b16 %v296
          %v305 = vpack.c.b16 %v304, %v303
          %v310 = vunpack.c.l.b16 %v297
          %v311 = vunpack.c.l.b16 %v298
          %v312 = vunpack.c.l.b16 %v299
          %v313 = vunpack.c.l.b16 %v300
          %v314 = vpack.c.b16 %v311, %v310
          %v315 = vpack.c.b16 %v313, %v312
          %vm318 = vcmask 261120
          %v320 = vsel %vm318, %v305, 0
          %322 = vmatpush.bf16.msra.mxu0 0
          %323 = vmatpush.bf16.msra.mxu0 0
          %324 = vmatpush.bf16.msra.mxu0 0
          %325 = vmatpush.bf16.msra.mxu0 0
          %326 = vmatpush.bf16.msra.mxu0 0
          %327 = vmatpush.bf16.msra.mxu0 0
          %328 = vmatpush.bf16.msra.mxu0 %v315
          %329 = vmatpush.bf16.msra.mxu0 %v314
          %330 = vmatmul.bf16.gmra.mxu0 %v320
          %v331 = vpop.f32.mrf.mxu0
          %v332 = vadd.f32 0.0, %v331
          %v333 = vpop.f32.mrf.mxu0
          %v334 = vadd.f32 0.0, %v333
          %335 = vdwg.mxu0
          %v336 = vmul.f32 %v332, 0.5
          %v337 = vmul.f32 %v334, 0.5
          %v338 = vmul.f32 %v332, 0.70710677
          %v339 = vmul.f32 %v334, 0.70710677
          %v340 = vand.u32 2147483647, %v338
          %v341 = vand.u32 2147483647, %v339
          %v342 = vmul.f32 %v340, 0.3275911
          %v343 = vmul.f32 %v341, 0.3275911
          %v344 = vadd.f32 %v342, 1.0
          %v345 = vadd.f32 %v343, 1.0
          %v346 = vrcp.pop %v344
          %v347 = vrcp.pop %v345
          %v348 = vmul.f32 %v346, 1.0614054
          %v349 = vmul.f32 %v347, 1.0614054
          %v350 = vadd.f32 %v348, -1.4531521
          %v351 = vadd.f32 %v349, -1.4531521
          %v352 = vmul.f32 %v350, %v346
          %v353 = vmul.f32 %v351, %v347
          %v354 = vadd.f32 %v352, 1.4214138
          %v355 = vadd.f32 %v353, 1.4214138
          %v356 = vmul.f32 %v354, %v346
          %v357 = vmul.f32 %v355, %v347
          %v358 = vadd.f32 %v356, -0.28449672
          %v359 = vadd.f32 %v357, -0.28449672
          %v360 = vmul.f32 %v358, %v346
          %v361 = vmul.f32 %v359, %v347
          %v362 = vadd.f32 %v360, 0.2548296
          %v363 = vadd.f32 %v361, 0.2548296
          %v364 = vmul.f32 %v362, %v346
          %v365 = vmul.f32 %v363, %v347
          %v366 = vsub.f32 0.0, %v340
          %v367 = vsub.f32 0.0, %v341
          %v368 = vmul.f32 %v366, %v340
          %v369 = vmul.f32 %v367, %v341
          %v370 = vmul.f32 %v368, 1.442695
          %v371 = vpow.pop %v370
          %v372 = vmul.f32 %v369, 1.442695
          %v373 = vpow.pop %v372
          %v374 = vmul.f32 %v364, %v371
          %v375 = vmul.f32 %v365, %v373
          %v376 = vsub.f32 1.0, %v374
          %v377 = vsub.f32 1.0, %v375
          %vm378 = vcmp.ge.f32.partialorder %v338, 0.0
          %vm379 = vcmp.ge.f32.partialorder %v339, 0.0
          %v380 = vsub.f32 0.0, %v376
          %v381 = vsub.f32 0.0, %v377
          %v382 = vsel %vm378, %v376, %v380
          %v383 = vsel %vm379, %v377, %v381
          %v384 = vadd.f32 %v382, 1.0
          %v385 = vadd.f32 %v383, 1.0
          %v386 = vmul.f32 %v336, %v384
          %v387 = vmul.f32 %v337, %v385
          %v388 = vpack.c.bf16 %v387, %v386
          %v389 = vld [vmem:[%s267] sm:$0xf]
          %v390 = vld [vmem:[%s267 + $0x4] sm:$0xf]
          %v391 = vld [vmem:[%s267 + $0x8] sm:$0xf]
          %v392 = vld [vmem:[%s267 + $0xc] sm:$0xf]
          %v393 = vld [vmem:[%s267 + $0x10] sm:$0xf]
          %v394 = vld [vmem:[%s267 + $0x14] sm:$0xf]
          %v395 = vld [vmem:[%s267 + $0x18] sm:$0xf]
          %v396 = vld [vmem:[%s267 + $0x1c] sm:$0xf]
          %v405 = vunpack.c.l.b16 %v389
          %v406 = vunpack.c.l.b16 %v390
          %v407 = vunpack.c.l.b16 %v391
          %v408 = vunpack.c.l.b16 %v392
          %v409 = vunpack.c.l.b16 %v393
          %v410 = vunpack.c.l.b16 %v394
          %v411 = vunpack.c.l.b16 %v395
          %v412 = vunpack.c.l.b16 %v396
          %v413 = vpack.c.b16 %v406, %v405
          %v414 = vpack.c.b16 %v408, %v407
          %v415 = vpack.c.b16 %v410, %v409
          %v416 = vpack.c.b16 %v412, %v411
          %vm421 = vcmask 523264
          %v423 = vsel %vm421, %v388, 0
          %425 = vmatpush.bf16.msra.mxu0 0
          %426 = vmatpush.bf16.msra.mxu0 0
          %427 = vmatpush.bf16.msra.mxu0 0
          %428 = vmatpush.bf16.msra.mxu0 0
          %429 = vmatpush.bf16.msra.mxu0 %v416
          %430 = vmatpush.bf16.msra.mxu0 %v415
          %431 = vmatpush.bf16.msra.mxu0 %v414
          %432 = vmatpush.bf16.msra.mxu0 %v413
          %433 = vmatmul.bf16.gmra.mxu0 %v423
          %v434 = vpop.f32.mrf.mxu0
          %v435 = vadd.f32 0.0, %v434
          %v436 = vpop.f32.mrf.mxu0
          %v437 = vadd.f32 0.0, %v436
          %438 = vdwg.mxu0
          %v439 = vlaneseq
          %v440 = vand.u32 %v439, 127
          %v441 = vstv %s30
          %vm442 = vcmp.eq.s32.totalorder %v440, %v441
          %v443 = vld [vmem:[%s272] sm:$0xff]
          %v444 = vld [vmem:[%s272 + $0x8] sm:$0xff]
          %v445 = vsel %vm442, %v443, 0.0
          %v446 = vsel %vm442, %v444, 0.0
          %vm447 = vcmask 31744
          %v448 = vsel %vm447, %v445, 0.0
          %449 = vadd.xlane.f32.xlu0 %v448
          %v450 = vpop.xlane.xlu0 %449
          %v451 = vsel %vm447, %v446, 0.0
          %452 = vadd.xlane.f32.xlu0 %v451
          %v453 = vpop.xlane.xlu0 %452
          %v454 = vld [vmem:[#allocation2] sm:$0xff]
          %v455 = vld [vmem:[#allocation2 + $0x8] sm:$0xff]
          %v456 = vmul.f32 %v450, %v435
          %v457 = vmul.f32 %v453, %v437
          %v458 = vadd.f32 %v454, %v456
          %v459 = vadd.f32 %v455, %v457
          %460 = vst.msk [vmem:[#allocation2] sm:$0xff] %vm318, %v458
          %461 = vst.msk [vmem:[#allocation2 + $0x8] sm:$0xff] %vm318, %v459
        $region44: #{fp8_linear_forward.1} parent=35 // pred_fallthru
          _
        %p462 = scmp.eq.s32.totalorder %s30, 3
        // Predicated region
        $region45: #{fp8_linear_forward.1} parent=35 // pred_check
          %p463 = pneg %p462
        $region46: #{fp8_linear_forward.1} parent=35 // pred_check_branch
          %465 = sbr.rel (%p463) target = $region48
        $region47: #{fp8_linear_forward.1} parent=35 // pred_region
          %v466 = vld [vmem:[#allocation2] sm:$0xff]
          %v467 = vld [vmem:[#allocation2 + $0x8] sm:$0xff]
          %v468 = vpack.c.bf16 %v466, %v466
          %v469 = vpack.c.bf16 %v467, %v467
          %vm470 = vcmask 257024
          %471 = vst.msk [vmem:[#allocation5] sm:$0xf] %vm470, %v468
          %472 = vst.msk [vmem:[#allocation5 + $0x4] sm:$0xf] %vm470, %v469
        $region48: #{fp8_linear_forward.1} parent=35 // pred_fallthru
          _
        // Predicated region
        $region49: #{fp8_linear_forward.1} parent=35 // pred_check
          %p473 = pneg %p159
        $region50: #{fp8_linear_forward.1} parent=35 // pred_check_branch
          %475 = sbr.rel (%p473) target = $region52
        $region51: #{fp8_linear_forward.1} parent=35 // pred_region
          %s476 = smul.u32 2, %s29
          %478 = vsyncadd [#allocation6], 0
          %s479 = smul.addr %s476, 4
          %s480 = scalar_lea.hbm %s5, %s479
          %s481 = sshll.u32 [#allocation5], 4
          %s482 = int_to_ptr.vmem [resolvable:$true] %s481
          %s483 = sshll.u32 %s480, 4
          %s484 = int_to_ptr.hbm [resolvable:$true] %s483
          %489 = dma.vmem_to_hbm [thread:$0]  %s482, 128, %s484, [#allocation6], 64, 64, 4
        $region52: #{fp8_linear_forward.1} parent=35 // pred_fallthru
          _
        // Predicated region
        $region53: #{fp8_linear_forward.1} parent=35 // pred_check
          %p490 = pneg %p159
        $region54: #{fp8_linear_forward.1} parent=35 // pred_check_branch
          %492 = sbr.rel (%p490) target = $region56
        $region55: #{fp8_linear_forward.1} parent=35 // pred_region
          %494 = dma.done [#allocation6], 128
        $region56: #{fp8_linear_forward.1} parent=35 // pred_fallthru
          _
      $region36: #{fp8_linear_forward.1} parent=5 // pred_fallthru
        _
      %p495 = scmp.le.s32.totalorder 2, %s20
      // Predicated region
      $region57: #{fp8_linear_forward.1} parent=5 // pred_check
        %p496 = pneg %p495
      $region58: #{fp8_linear_forward.1} parent=5 // pred_check_branch
        %498 = sbr.rel (%p496) target = $region60
      $region59: #{fp8_linear_forward.1} parent=5 // pred_region
        %s499 = ssub.s32 %s20, 2
      $region60: #{fp8_linear_forward.1} parent=5 // pred_fallthru
        _
    $region6: #{fp8_linear_forward.1} parent=1 // loop_footer
      %s24 = sadd.s32 1, %s20
    $region7: #{fp8_linear_forward.1} parent=1 // loop_footer_branch
      %19 = sbr.rel target = $region3
    $region8: #{fp8_linear_forward.1} parent=1 // loop_exit
      _
    %500 = vsyncpa [#allocation6], 1
    %s501 = scalar_lea.sflag [#allocation6], 1
    %502 = vsyncpa %s501, 1

</llo_original>
